<compile_context>
chip_gen: v7x
topology: tpu7x:2x2x1
jax: 0.10.0
libtpu: 0.0.40
codegen_flags: <defaults>
</compile_context>

<pallas_src>
import functools

import jax
import jax.numpy as jnp
from jax import lax
from jax.experimental import pallas as pl
from jax.experimental.pallas import tpu as pltpu

LN_EPS = 1e-5
TILE_B = 2048  # rows per grid step (f32, 128-lane padded -> ~1 MiB/buffer)


def _round_up(x, m):
    return (x + m - 1) // m * m


def _deep_entropy_kernel(x_ref,
                         w1f_ref, b1f_ref, g1f_ref, be1f_ref,
                         w2f_ref, b2f_ref,
                         o_ref, *, num_parameters, num_used_features, h1, h2):
    P = num_parameters
    F = num_used_features
    head_w = 3 + P            # [ref | 2 extra | parameters] -> refnet/paranet inputs
    Hf = h1 + h2

    x_blk = x_ref[...]                                  # [TB, D_IN]
    head = x_blk[:, :head_w]                            # lane offset 0 -> MXU operand
    ref = x_blk[:, 0:1]                                 # [TB, 1]
    ent = x_blk[:, head_w:head_w + F]                   # [TB, F]

    # Fused first layer: paranet (cols 0..H1) + refnet (cols H1..H1+H2) in one dot.
    h = jnp.dot(head, w1f_ref[...],
                preferred_element_type=jnp.float32) + b1f_ref[...]   # [TB, H1+H2]

    # LayerNorm statistics restricted to each sub-network's logical width.
    hp = h[:, :h1]
    hr = h[:, h1:Hf]
    mu_p = jnp.mean(hp, axis=-1, keepdims=True)
    var_p = jnp.mean((hp - mu_p) ** 2, axis=-1, keepdims=True)
    mu_r = jnp.mean(hr, axis=-1, keepdims=True)
    var_r = jnp.mean((hr - mu_r) ** 2, axis=-1, keepdims=True)

    col = lax.broadcasted_iota(jnp.int32, (1, Hf), 1)
    is_p = col < h1                                      # [1, Hf] lane mask
    mu = jnp.where(is_p, mu_p, mu_r)                     # [TB, Hf]
    inv = jnp.where(is_p,
                    lax.rsqrt(var_p + LN_EPS),
                    lax.rsqrt(var_r + LN_EPS))
    hn = jnp.maximum((h - mu) * inv * g1f_ref[...] + be1f_ref[...], 0.0)

    # Fused second layer (block diagonal): [TB, F + 1].
    y = jnp.dot(hn, w2f_ref[...],
                preferred_element_type=jnp.float32) + b2f_ref[...]
    a = y[:, :F]                                         # paranet coefficients
    rout = y[:, F:F + 1]                                 # refnet correction

    # out = sum(paranet(x) * entropies) + (ref + refnet(rx))
    para = jnp.sum(a * ent, axis=-1, keepdims=True)      # [TB, 1]
    o_ref[...] = para + ref + rout


def deep_entropy_forward(x_in, params, *, num_parameters, num_used_features,
                         tile_b=TILE_B):
    P = num_parameters
    F = num_used_features
    B, D_IN = x_in.shape
    H1 = params["w1"].shape[1]
    H2 = params["rw1"].shape[1]
    head_w = 3 + P
    assert D_IN >= head_w + F

    # ---- fuse the two sub-network weight pairs (done once, outside the grid) ----
    w1f = jnp.zeros((head_w, H1 + H2), jnp.float32)
    w1f = w1f.at[3:3 + P, :H1].set(params["w1"])          # paranet uses cols 3..3+P
    w1f = w1f.at[1:3 + P, H1:].set(params["rw1"])         # refnet uses cols 1..3+P
    b1f = jnp.concatenate([params["b1"], params["rb1"]], axis=1)
    g1f = jnp.concatenate([params["g1"], params["rg1"]], axis=1)
    be1f = jnp.concatenate([params["be1"], params["rbe1"]], axis=1)

    w2f = jnp.zeros((H1 + H2, F + 1), jnp.float32)
    w2f = w2f.at[:H1, :F].set(params["w2"])
    w2f = w2f.at[H1:, F:].set(params["rw2"])
    b2f = jnp.concatenate([params["b2"], params["rb2"]], axis=1)

    # ---- batch tiling: tile divisible by 8, pad B up to a tile multiple ----
    tile = min(tile_b, _round_up(B, 8))
    B_pad = _round_up(B, tile)
    if B_pad != B:
        x_in = jnp.pad(x_in, ((0, B_pad - B), (0, 0)))
    grid = (B_pad // tile,)

    kernel = functools.partial(_deep_entropy_kernel,
                               num_parameters=P, num_used_features=F,
                               h1=H1, h2=H2)

    def const_spec(arr):
        # Full-array block, constant index_map -> stays resident in VMEM.
        return pl.BlockSpec(arr.shape, lambda i: (0, 0))

    weight_args = (w1f, b1f, g1f, be1f, w2f, b2f)

    out = pl.pallas_call(
        kernel,
        out_shape=jax.ShapeDtypeStruct((B_pad, 1), jnp.float32),
        grid=grid,
        in_specs=[pl.BlockSpec((tile, D_IN), lambda i: (i, 0))]
                 + [const_spec(a) for a in weight_args],
        out_specs=pl.BlockSpec((tile, 1), lambda i: (i, 0)),
        compiler_params=pltpu.CompilerParams(
            dimension_semantics=("parallel",)),
    )(x_in, *weight_args)
    return out[:B, 0]                                    # matches torch.squeeze -> [B]


def init_params(key, num_parameters, num_used_features, h1=32, h2=16):
    """Deterministic synthetic parameters (PyTorch Linear stored as [in, out])."""
    ks = jax.random.split(key, 4)
    P, F = num_parameters, num_used_features

    def lin(k, fan_in, fan_out):
        kw, kb = jax.random.split(k)
        bound = 1.0 / jnp.sqrt(fan_in)
        w = jax.random.uniform(kw, (fan_in, fan_out), jnp.float32, -bound, bound)
        b = jax.random.uniform(kb, (1, fan_out), jnp.float32, -bound, bound)
        return w, b

    w1, b1 = lin(ks[0], P, h1)
    w2, b2 = lin(ks[1], h1, F)
    rw1, rb1 = lin(ks[2], P + 2, h2)
    rw2, rb2 = lin(ks[3], h2, 1)
    return {
        "w1": w1, "b1": b1,
        "g1": jnp.ones((1, h1), jnp.float32), "be1": jnp.zeros((1, h1), jnp.float32),
        "w2": w2, "b2": b2,
        "rw1": rw1, "rb1": rb1,
        "rg1": jnp.ones((1, h2), jnp.float32), "rbe1": jnp.zeros((1, h2), jnp.float32),
        "rw2": rw2, "rb2": rb2,
    }


def reference_forward(x_in, p, *, num_parameters, num_used_features):
    """Pure-JAX reference mirroring the PyTorch forward (un-fused)."""
    P, F = num_parameters, num_used_features
    ref = x_in[:, 0:1]
    rx = x_in[:, 1:3 + P]
    x = x_in[:, 3:3 + P]
    ent = x_in[:, 3 + P:3 + P + F]

    def ln(h, g, b):
        mu = jnp.mean(h, axis=-1, keepdims=True)
        var = jnp.mean((h - mu) ** 2, axis=-1, keepdims=True)
        return (h - mu) * lax.rsqrt(var + LN_EPS) * g + b

    h = jnp.maximum(ln(x @ p["w1"] + p["b1"], p["g1"], p["be1"]), 0.0)
    a = h @ p["w2"] + p["b2"]
    para = jnp.sum(a * ent, axis=1)

    r = jnp.maximum(ln(rx @ p["rw1"] + p["rb1"], p["rg1"], p["rbe1"]), 0.0)
    rout = r @ p["rw2"] + p["rb2"]
    return para + jnp.squeeze(ref + rout, axis=-1)


if __name__ == "__main__":
    # Small shapes consistent with the module:
    #   num_parameters=4, num_features=6 (all used, no ignored features)
    #   -> input width = 1 + 2 + 4 + 6 = 13
    NUM_PARAMETERS = 4
    NUM_FEATURES = 6
    D_IN = 3 + NUM_PARAMETERS + NUM_FEATURES

    key = jax.random.PRNGKey(0)
    kx, kp, kx2 = jax.random.split(key, 3)
    params = init_params(kp, NUM_PARAMETERS, NUM_FEATURES)

    # Primary small-shape check (single grid step).
    B = 8
    x_in = jax.random.normal(kx, (B, D_IN), jnp.float32)
    out = deep_entropy_forward(x_in, params,
                               num_parameters=NUM_PARAMETERS,
                               num_used_features=NUM_FEATURES)
    out = jax.block_until_ready(out)
    ref_out = reference_forward(x_in, params,
                                num_parameters=NUM_PARAMETERS,
                                num_used_features=NUM_FEATURES)
    assert out.shape == (B,), out.shape
    assert jnp.allclose(out, ref_out, atol=1e-4, rtol=1e-4), (out, ref_out)

    # Multi-tile check: exercises the batch grid, pipelining and padding path.
    B2 = 200
    x2 = jax.random.normal(kx2, (B2, D_IN), jnp.float32)
    out2 = deep_entropy_forward(x2, params,
                                num_parameters=NUM_PARAMETERS,
                                num_used_features=NUM_FEATURES,
                                tile_b=64)
    out2 = jax.block_until_ready(out2)
    ref2 = reference_forward(x2, params,
                             num_parameters=NUM_PARAMETERS,
                             num_used_features=NUM_FEATURES)
    assert out2.shape == (B2,), out2.shape
    assert jnp.allclose(out2, ref2, atol=1e-4, rtol=1e-4)

    print("KERNEL_OK")
</pallas_src>

<mosaic_0001>
module attributes {stable_mosaic.version = 11 : i64} {
  func.func @_deep_entropy_kernel(%arg0: i32, %arg1: memref<8x13xf32, #tpu.memory_space<vmem>>, %arg2: memref<7x48xf32, #tpu.memory_space<vmem>>, %arg3: memref<1x48xf32, #tpu.memory_space<vmem>>, %arg4: memref<1x48xf32, #tpu.memory_space<vmem>>, %arg5: memref<1x48xf32, #tpu.memory_space<vmem>>, %arg6: memref<48x7xf32, #tpu.memory_space<vmem>>, %arg7: memref<1x7xf32, #tpu.memory_space<vmem>>, %arg8: memref<8x1xf32, #tpu.memory_space<vmem>>) attributes {dimension_semantics = [#tpu.dimension_semantics<parallel>], iteration_bounds = array<i64: 1>, scalar_prefetch = 0 : i64, scratch_operands = 0 : i64, tpu.core_type = #tpu.core_type<tc>, window_params = [{transform_indices = @transform_0, window_bounds = array<i64: 8, 13>}, {pipeline_mode = #tpu.pipeline_mode<synchronous>, transform_indices = @transform_1, window_bounds = array<i64: 7, 48>}, {pipeline_mode = #tpu.pipeline_mode<synchronous>, transform_indices = @transform_2, window_bounds = array<i64: 1, 48>}, {pipeline_mode = #tpu.pipeline_mode<synchronous>, transform_indices = @transform_3, window_bounds = array<i64: 1, 48>}, {pipeline_mode = #tpu.pipeline_mode<synchronous>, transform_indices = @transform_4, window_bounds = array<i64: 1, 48>}, {pipeline_mode = #tpu.pipeline_mode<synchronous>, transform_indices = @transform_5, window_bounds = array<i64: 48, 7>}, {pipeline_mode = #tpu.pipeline_mode<synchronous>, transform_indices = @transform_6, window_bounds = array<i64: 1, 7>}, {transform_indices = @transform_7, window_bounds = array<i64: 8, 1>}]} {
    %c0 = arith.constant 0 : index
    %c0_0 = arith.constant 0 : index
    %0 = vector.load %arg1[%c0, %c0_0] : memref<8x13xf32, #tpu.memory_space<vmem>>, vector<8x13xf32>
    %1 = vector.extract_strided_slice %0 {offsets = [0, 0], sizes = [8, 7], strides = [1, 1]} : vector<8x13xf32> to vector<8x7xf32>
    %2 = vector.extract_strided_slice %0 {offsets = [0, 0], sizes = [8, 1], strides = [1, 1]} : vector<8x13xf32> to vector<8x1xf32>
    %3 = vector.extract_strided_slice %0 {offsets = [0, 7], sizes = [8, 6], strides = [1, 1]} : vector<8x13xf32> to vector<8x6xf32>
    %c0_1 = arith.constant 0 : index
    %c0_2 = arith.constant 0 : index
    %4 = vector.load %arg2[%c0_1, %c0_2] : memref<7x48xf32, #tpu.memory_space<vmem>>, vector<7x48xf32>
    %cst = arith.constant dense<0.000000e+00> : vector<8x48xf32>
    %5 = tpu.matmul %1, %4, %cst {dimension_numbers = #tpu.dot_dimension_numbers<[1], [0], [0], [1], [0, 0, 1, 1], [], []>} : vector<8x7xf32>, vector<7x48xf32>, vector<8x48xf32> -> vector<8x48xf32>
    %c0_3 = arith.constant 0 : index
    %c0_4 = arith.constant 0 : index
    %6 = vector.load %arg3[%c0_3, %c0_4] : memref<1x48xf32, #tpu.memory_space<vmem>>, vector<1x48xf32>
    %7 = vector.broadcast %6 : vector<1x48xf32> to vector<8x48xf32>
    %8 = arith.addf %5, %7 : vector<8x48xf32>
    %9 = vector.extract_strided_slice %8 {offsets = [0, 0], sizes = [8, 32], strides = [1, 1]} : vector<8x48xf32> to vector<8x32xf32>
    %10 = vector.extract_strided_slice %8 {offsets = [0, 32], sizes = [8, 16], strides = [1, 1]} : vector<8x48xf32> to vector<8x16xf32>
    %cst_5 = arith.constant dense<0.000000e+00> : vector<8xf32>
    %11 = vector.multi_reduction <add>, %9, %cst_5 [1] : vector<8x32xf32> to vector<8xf32>
    %12 = vector.shape_cast %11 : vector<8xf32> to vector<8x1xf32>
    %cst_6 = arith.constant 3.200000e+01 : f32
    %13 = vector.broadcast %cst_6 : f32 to vector<8x1xf32>
    %14 = arith.divf %12, %13 : vector<8x1xf32>
    %15 = vector.broadcast %14 : vector<8x1xf32> to vector<8x32xf32>
    %16 = arith.subf %9, %15 : vector<8x32xf32>
    %17 = arith.mulf %16, %16 : vector<8x32xf32>
    %cst_7 = arith.constant dense<0.000000e+00> : vector<8xf32>
    %18 = vector.multi_reduction <add>, %17, %cst_7 [1] : vector<8x32xf32> to vector<8xf32>
    %19 = vector.shape_cast %18 : vector<8xf32> to vector<8x1xf32>
    %cst_8 = arith.constant 3.200000e+01 : f32
    %20 = vector.broadcast %cst_8 : f32 to vector<8x1xf32>
    %21 = arith.divf %19, %20 : vector<8x1xf32>
    %cst_9 = arith.constant dense<0.000000e+00> : vector<8xf32>
    %22 = vector.multi_reduction <add>, %10, %cst_9 [1] : vector<8x16xf32> to vector<8xf32>
    %23 = vector.shape_cast %22 : vector<8xf32> to vector<8x1xf32>
    %cst_10 = arith.constant 1.600000e+01 : f32
    %24 = vector.broadcast %cst_10 : f32 to vector<8x1xf32>
    %25 = arith.divf %23, %24 : vector<8x1xf32>
    %26 = vector.broadcast %25 : vector<8x1xf32> to vector<8x16xf32>
    %27 = arith.subf %10, %26 : vector<8x16xf32>
    %28 = arith.mulf %27, %27 : vector<8x16xf32>
    %cst_11 = arith.constant dense<0.000000e+00> : vector<8xf32>
    %29 = vector.multi_reduction <add>, %28, %cst_11 [1] : vector<8x16xf32> to vector<8xf32>
    %30 = vector.shape_cast %29 : vector<8xf32> to vector<8x1xf32>
    %cst_12 = arith.constant 1.600000e+01 : f32
    %31 = vector.broadcast %cst_12 : f32 to vector<8x1xf32>
    %32 = arith.divf %30, %31 : vector<8x1xf32>
    %33 = tpu.iota {dimensions = array<i32: 1>} : vector<1x48xi32>
    %c32_i32 = arith.constant 32 : i32
    %34 = vector.broadcast %c32_i32 : i32 to vector<1x48xi32>
    %35 = arith.cmpi slt, %33, %34 : vector<1x48xi32>
    %36 = vector.shape_cast %35 : vector<1x48xi1> to vector<1x48xi1>
    %37 = vector.broadcast %36 : vector<1x48xi1> to vector<8x48xi1>
    %38 = vector.shape_cast %14 : vector<8x1xf32> to vector<8x1xf32>
    %39 = vector.broadcast %38 : vector<8x1xf32> to vector<8x48xf32>
    %40 = vector.shape_cast %25 : vector<8x1xf32> to vector<8x1xf32>
    %41 = vector.broadcast %40 : vector<8x1xf32> to vector<8x48xf32>
    %42 = arith.select %37, %39, %41 : vector<8x48xi1>, vector<8x48xf32>
    %cst_13 = arith.constant 9.99999974E-6 : f32
    %43 = vector.broadcast %cst_13 : f32 to vector<8x1xf32>
    %44 = arith.addf %21, %43 : vector<8x1xf32>
    %45 = math.rsqrt %44 : vector<8x1xf32>
    %cst_14 = arith.constant 9.99999974E-6 : f32
    %46 = vector.broadcast %cst_14 : f32 to vector<8x1xf32>
    %47 = arith.addf %32, %46 : vector<8x1xf32>
    %48 = math.rsqrt %47 : vector<8x1xf32>
    %49 = vector.shape_cast %35 : vector<1x48xi1> to vector<1x48xi1>
    %50 = vector.broadcast %49 : vector<1x48xi1> to vector<8x48xi1>
    %51 = vector.shape_cast %45 : vector<8x1xf32> to vector<8x1xf32>
    %52 = vector.broadcast %51 : vector<8x1xf32> to vector<8x48xf32>
    %53 = vector.shape_cast %48 : vector<8x1xf32> to vector<8x1xf32>
    %54 = vector.broadcast %53 : vector<8x1xf32> to vector<8x48xf32>
    %55 = arith.select %50, %52, %54 : vector<8x48xi1>, vector<8x48xf32>
    %56 = arith.subf %8, %42 : vector<8x48xf32>
    %57 = arith.mulf %56, %55 : vector<8x48xf32>
    %c0_15 = arith.constant 0 : index
    %c0_16 = arith.constant 0 : index
    %58 = vector.load %arg4[%c0_15, %c0_16] : memref<1x48xf32, #tpu.memory_space<vmem>>, vector<1x48xf32>
    %59 = vector.broadcast %58 : vector<1x48xf32> to vector<8x48xf32>
    %60 = arith.mulf %57, %59 : vector<8x48xf32>
    %c0_17 = arith.constant 0 : index
    %c0_18 = arith.constant 0 : index
    %61 = vector.load %arg5[%c0_17, %c0_18] : memref<1x48xf32, #tpu.memory_space<vmem>>, vector<1x48xf32>
    %62 = vector.broadcast %61 : vector<1x48xf32> to vector<8x48xf32>
    %63 = arith.addf %60, %62 : vector<8x48xf32>
    %cst_19 = arith.constant 0.000000e+00 : f32
    %64 = vector.broadcast %cst_19 : f32 to vector<8x48xf32>
    %65 = arith.maximumf %63, %64 : vector<8x48xf32>
    %c0_20 = arith.constant 0 : index
    %c0_21 = arith.constant 0 : index
    %66 = vector.load %arg6[%c0_20, %c0_21] : memref<48x7xf32, #tpu.memory_space<vmem>>, vector<48x7xf32>
    %cst_22 = arith.constant dense<0.000000e+00> : vector<8x7xf32>
    %67 = tpu.matmul %65, %66, %cst_22 {dimension_numbers = #tpu.dot_dimension_numbers<[1], [0], [0], [1], [0, 0, 1, 1], [], []>} : vector<8x48xf32>, vector<48x7xf32>, vector<8x7xf32> -> vector<8x7xf32>
    %c0_23 = arith.constant 0 : index
    %c0_24 = arith.constant 0 : index
    %68 = vector.load %arg7[%c0_23, %c0_24] : memref<1x7xf32, #tpu.memory_space<vmem>>, vector<1x7xf32>
    %69 = vector.broadcast %68 : vector<1x7xf32> to vector<8x7xf32>
    %70 = arith.addf %67, %69 : vector<8x7xf32>
    %71 = vector.extract_strided_slice %70 {offsets = [0, 0], sizes = [8, 6], strides = [1, 1]} : vector<8x7xf32> to vector<8x6xf32>
    %72 = vector.extract_strided_slice %70 {offsets = [0, 6], sizes = [8, 1], strides = [1, 1]} : vector<8x7xf32> to vector<8x1xf32>
    %73 = arith.mulf %71, %3 : vector<8x6xf32>
    %cst_25 = arith.constant dense<0.000000e+00> : vector<8xf32>
    %74 = vector.multi_reduction <add>, %73, %cst_25 [1] : vector<8x6xf32> to vector<8xf32>
    %75 = vector.shape_cast %74 : vector<8xf32> to vector<8x1xf32>
    %76 = arith.addf %75, %2 : vector<8x1xf32>
    %77 = arith.addf %76, %72 : vector<8x1xf32>
    %c0_26 = arith.constant 0 : index
    %c0_27 = arith.constant 0 : index
    %78 = vector.load %arg8[%c0_26, %c0_27] : memref<8x1xf32, #tpu.memory_space<vmem>>, vector<8x1xf32>
    tpu.vector_store %arg8[%c0_26, %c0_27], %77 {strides = array<i32>} : memref<8x1xf32, #tpu.memory_space<vmem>>, vector<8x1xf32>,
    return
  }
  func.func @transform_0(%arg0: i32) -> (i32, i32) {
    %c0_i32 = arith.constant 0 : i32
    %c0_i32_0 = arith.constant 0 : i32
    return %arg0, %c0_i32 : i32, i32
  }
  func.func @transform_1(%arg0: i32) -> (i32, i32) {
    %c0_i32 = arith.constant 0 : i32
    %c0_i32_0 = arith.constant 0 : i32
    %c0_i32_1 = arith.constant 0 : i32
    return %c0_i32, %c0_i32_0 : i32, i32
  }
  func.func @transform_2(%arg0: i32) -> (i32, i32) {
    %c0_i32 = arith.constant 0 : i32
    %c0_i32_0 = arith.constant 0 : i32
    %c0_i32_1 = arith.constant 0 : i32
    return %c0_i32, %c0_i32_0 : i32, i32
  }
  func.func @transform_3(%arg0: i32) -> (i32, i32) {
    %c0_i32 = arith.constant 0 : i32
    %c0_i32_0 = arith.constant 0 : i32
    %c0_i32_1 = arith.constant 0 : i32
    return %c0_i32, %c0_i32_0 : i32, i32
  }
  func.func @transform_4(%arg0: i32) -> (i32, i32) {
    %c0_i32 = arith.constant 0 : i32
    %c0_i32_0 = arith.constant 0 : i32
    %c0_i32_1 = arith.constant 0 : i32
    return %c0_i32, %c0_i32_0 : i32, i32
  }
  func.func @transform_5(%arg0: i32) -> (i32, i32) {
    %c0_i32 = arith.constant 0 : i32
    %c0_i32_0 = arith.constant 0 : i32
    %c0_i32_1 = arith.constant 0 : i32
    return %c0_i32, %c0_i32_0 : i32, i32
  }
  func.func @transform_6(%arg0: i32) -> (i32, i32) {
    %c0_i32 = arith.constant 0 : i32
    %c0_i32_0 = arith.constant 0 : i32
    %c0_i32_1 = arith.constant 0 : i32
    return %c0_i32, %c0_i32_0 : i32, i32
  }
  func.func @transform_7(%arg0: i32) -> (i32, i32) {
    %c0_i32 = arith.constant 0 : i32
    %c0_i32_0 = arith.constant 0 : i32
    return %arg0, %c0_i32 : i32, i32
  }
}

</mosaic_0001>

<llo_original>
// kernel: tpu_custom_call.1
$region0: #{tpu_custom_call.1}
  #allocation0 [shape = 'u32[]', space=smem, size = 0x4, offset = 0x4, fixed_abs, tag = 'smem constant byte address 0x4 - core index']
  #allocation1 [shape = 'u32[144,128]{1,0:T(1,128)}', space=vmem, size = 0x12000, scoped, tag = 'internal scratch']
  %s0 = inlined_call_operand.vmem [shape: f32[8,13], index: 0, kind: input, shape index: {}]
  %s1 = inlined_call_operand.vmem [shape: f32[7,48], index: 1, kind: input, shape index: {}]
  %s2 = inlined_call_operand.vmem [shape: f32[1,48], index: 2, kind: input, shape index: {}]
  %s3 = inlined_call_operand.vmem [shape: f32[1,48], index: 3, kind: input, shape index: {}]
  %s4 = inlined_call_operand.vmem [shape: f32[1,48], index: 4, kind: input, shape index: {}]
  %s5 = inlined_call_operand.vmem [shape: f32[48,7], index: 5, kind: input, shape index: {}]
  %s6 = inlined_call_operand.vmem [shape: f32[1,7], index: 6, kind: input, shape index: {}]
  %s7 = inlined_call_operand.vmem [shape: f32[8,1], index: 7, kind: output, shape index: {}]
  %s8 = sld [smem:[#allocation0]]
  $region38: #{tpu_custom_call.1} parent=0
    _
  %s10 = ssub.s32 1, %s8
  %s11 = scalar_select 0, %s10, %s8
  // Predicated region
  $region2: #{tpu_custom_call.1} parent=0 // pred_check
    _
  $region3: #{tpu_custom_call.1} parent=0 // pred_check_branch
    %13 = sbr.rel (0) target = $region5
  $region4: #{tpu_custom_call.1} parent=0 // pred_region
    _
  $region5: #{tpu_custom_call.1} parent=0 // pred_fallthru
    _
  // Predicated region
  $region6: #{tpu_custom_call.1} parent=0 // pred_check
    _
  $region7: #{tpu_custom_call.1} parent=0 // pred_check_branch
    %15 = sbr.rel (0) target = $region9
  $region8: #{tpu_custom_call.1} parent=0 // pred_region
    _
  $region9: #{tpu_custom_call.1} parent=0 // pred_fallthru
    _
  // Predicated region
  $region10: #{tpu_custom_call.1} parent=0 // pred_check
    _
  $region11: #{tpu_custom_call.1} parent=0 // pred_check_branch
    %17 = sbr.rel (0) target = $region13
  $region12: #{tpu_custom_call.1} parent=0 // pred_region
    _
  $region13: #{tpu_custom_call.1} parent=0 // pred_fallthru
    _
  // Predicated region
  $region14: #{tpu_custom_call.1} parent=0 // pred_check
    _
  $region15: #{tpu_custom_call.1} parent=0 // pred_check_branch
    %19 = sbr.rel (0) target = $region17
  $region16: #{tpu_custom_call.1} parent=0 // pred_region
    _
  $region17: #{tpu_custom_call.1} parent=0 // pred_fallthru
    _
  // Predicated region
  $region18: #{tpu_custom_call.1} parent=0 // pred_check
    _
  $region19: #{tpu_custom_call.1} parent=0 // pred_check_branch
    %21 = sbr.rel (0) target = $region21
  $region20: #{tpu_custom_call.1} parent=0 // pred_region
    _
  $region21: #{tpu_custom_call.1} parent=0 // pred_fallthru
    _
  // Predicated region
  $region22: #{tpu_custom_call.1} parent=0 // pred_check
    _
  $region23: #{tpu_custom_call.1} parent=0 // pred_check_branch
    %23 = sbr.rel (0) target = $region25
  $region24: #{tpu_custom_call.1} parent=0 // pred_region
    _
  $region25: #{tpu_custom_call.1} parent=0 // pred_fallthru
    _
  // Predicated region
  $region26: #{tpu_custom_call.1} parent=0 // pred_check
    _
  $region27: #{tpu_custom_call.1} parent=0 // pred_check_branch
    %25 = sbr.rel (0) target = $region29
  $region28: #{tpu_custom_call.1} parent=0 // pred_region
    _
  $region29: #{tpu_custom_call.1} parent=0 // pred_fallthru
    _
  %v26 = vld [vmem:[%s0] sm:$0xff]
  %v27 = vld [vmem:[%s1] sm:$0x7f]
  %v28 = vld [vmem:[%s2] sm:$0x1]
  %v30 = vlaneseq
  %v31 = vshrl.u32 %v30, 7
  %v32 = vsub.s32 0, %v31
  %v33 = vrot.slane %v28, %v32
  %vm35 = vcmask 56320
  %v37 = vsel %vm35, %v26, 0
  %vm39 = vcmask 1046528
  %v41 = vsel %vm39, %v27, 0
  %43 = vmatprep.subr.mxu0 0.0
  %44 = vmatpush1.msra.mxu0 %v41
  %45 = vmatprep.subr.mxu0 0.0
  %46 = vmatpush1.msra.mxu0 0.0
  %47 = vmatprep.subr.mxu0 0.0
  %48 = vmatpush1.msra.mxu0 0.0
  %49 = vmatprep.subr.mxu0 0.0
  %50 = vmatpush1.msra.mxu0 0.0
  %51 = vmatprep.subr.mxu0 0.0
  %52 = vmatpush1.msra.mxu0 0.0
  %53 = vmatprep.subr.mxu0 0.0
  %54 = vmatpush1.msra.mxu0 0.0
  %55 = vmatprep.subr.mxu0 0.0
  %56 = vmatpush1.msra.mxu0 0.0
  %57 = vmatprep.subr.mxu0 0.0
  %58 = vmatpush1.msra.mxu0 0.0
  %59 = vmatprep.subr.mxu0 0.0
  %60 = vmatpush1.msra.mxu0 0.0
  %61 = vmatprep.subr.mxu0 0.0
  %62 = vmatpush1.msra.mxu0 0.0
  %63 = vmatprep.subr.mxu0 0.0
  %64 = vmatpush1.msra.mxu0 0.0
  %65 = vmatprep.subr.mxu0 0.0
  %66 = vmatpush1.msra.mxu0 0.0
  %67 = vmatprep.subr.mxu0 0.0
  %68 = vmatpush1.msra.mxu0 0.0
  %69 = vmatprep.subr.mxu0 0.0
  %70 = vmatpush1.msra.mxu0 0.0
  %71 = vmatprep.subr.mxu0 0.0
  %72 = vmatpush1.msra.mxu0 0.0
  %73 = vmatprep.subr.mxu0 0.0
  %74 = vmatpush1.msra.mxu0 0.0
  %75 = vmatprep.subr.mxu0 0.0
  %76 = vmatpush1.msra.mxu0 0.0
  %77 = vmatprep.subr.mxu0 0.0
  %78 = vmatpush1.msra.mxu0 0.0
  %79 = vmatprep.subr.mxu0 0.0
  %80 = vmatpush1.msra.mxu0 0.0
  %81 = vmatprep.subr.mxu0 0.0
  %82 = vmatpush1.msra.mxu0 0.0
  %83 = vmatprep.subr.mxu0 0.0
  %84 = vmatpush1.msra.mxu0 0.0
  %85 = vmatprep.subr.mxu0 0.0
  %86 = vmatpush1.msra.mxu0 0.0
  %87 = vmatprep.subr.mxu0 0.0
  %88 = vmatpush1.msra.mxu0 0.0
  %89 = vmatprep.subr.mxu0 0.0
  %90 = vmatpush1.msra.mxu0 0.0
  %91 = vmatprep.subr.mxu0 0.0
  %92 = vmatpush1.msra.mxu0 0.0
  %93 = vmatprep.subr.mxu0 0.0
  %94 = vmatpush1.msra.mxu0 0.0
  %95 = vmatprep.subr.mxu0 0.0
  %96 = vmatpush1.msra.mxu0 0.0
  %97 = vmatprep.subr.mxu0 0.0
  %98 = vmatpush1.msra.mxu0 0.0
  %99 = vmatprep.subr.mxu0 0.0
  %100 = vmatpush1.msra.mxu0 0.0
  %101 = vmatprep.subr.mxu0 0.0
  %102 = vmatpush1.msra.mxu0 0.0
  %103 = vmatprep.subr.mxu0 0.0
  %104 = vmatpush1.msra.mxu0 0.0
  %105 = vmatprep.subr.mxu0 0.0
  %106 = vmatpush1.msra.mxu0 0.0
  %107 = vmatprep.mubr.f32.mxu0 0.0
  %108 = vmatmul.mubr.f32.gmra.mrb[0].mxu0 %v37
  %v109 = vpop.f32.mrb[0].mxu0
  %v110 = vadd.f32 %v33, %v109
  %v111 = vpop.f32.mrb[0].mxu0
  %112 = vdwg.mxu0
  %vm113 = vcmask 261120
  %v114 = vsel %vm113, %v110, 0.0
  %115 = vadd.xlane.f32.xlu0 %v114
  %v116 = vpop.xlane.xlu0 %115
  %v117 = vrcp.pop 32.0
  %v118 = vmul.f32 %v116, %v117
  %v119 = vsub.f32 %v110, %v118
  %v120 = vmul.f32 %v119, %v119
  %v121 = vsel %vm113, %v120, 0.0
  %122 = vadd.xlane.f32.xlu0 %v121
  %v123 = vpop.xlane.xlu0 %122
  %v124 = vmul.f32 %v123, %v117
  %126 = vrot.lane.b32.xlu0 %v110, 96
  %v127 = vpop.permute.xlu0 %126
  %vm129 = vcmask 130048
  %v130 = vsel %vm129, %v127, 0.0
  %131 = vadd.xlane.f32.xlu0 %v130
  %v132 = vpop.xlane.xlu0 %131
  %v133 = vrcp.pop 16.0
  %v134 = vmul.f32 %v132, %v133
  %v135 = vsub.f32 %v110, %v134
  %v136 = vmul.f32 %v135, %v135
  %138 = vrot.lane.b32.xlu0 %v136, 96
  %v139 = vpop.permute.xlu0 %138
  %v141 = vsel %vm129, %v139, 0.0
  %142 = vadd.xlane.f32.xlu0 %v141
  %v143 = vpop.xlane.xlu0 %142
  %v144 = vmul.f32 %v143, %v133
  %v145 = vlaneseq
  %v146 = vand.u32 %v145, 127
  %vm147 = vcmp.lt.s32.totalorder %v146, 32
  %v148 = vsel %vm147, 1, 0
  %vm149 = vcmp.eq.s32.totalorder %v148, 1
  %v150 = vsel %vm149, %v118, %v134
  %v151 = vadd.f32 %v124, 1e-05
  %v152 = vrsqrt.pop %v151
  %v153 = vadd.f32 %v144, 1e-05
  %v154 = vrsqrt.pop %v153
  %v155 = vsel %vm149, %v152, %v154
  %v156 = vsub.f32 %v110, %v150
  %v157 = vmul.f32 %v156, %v155
  %v158 = vld [vmem:[%s3] sm:$0x1]
  %v160 = vlaneseq
  %v161 = vshrl.u32 %v160, 7
  %v162 = vsub.s32 0, %v161
  %v163 = vrot.slane %v158, %v162
  %v165 = vmul.f32 %v157, %v163
  %v166 = vld [vmem:[%s4] sm:$0x1]
  %v168 = vlaneseq
  %v169 = vshrl.u32 %v168, 7
  %v170 = vsub.s32 0, %v169
  %v171 = vrot.slane %v166, %v170
  %v173 = vadd.f32 %v165, %v171
  %v174 = vmax.f32 %v173, 0.0
  %v175 = vld [vmem:[%s5] sm:$0xff]
  %v176 = vld [vmem:[%s5 + $0x8] sm:$0xff]
  %v177 = vld [vmem:[%s5 + $0x10] sm:$0xff]
  %v178 = vld [vmem:[%s5 + $0x18] sm:$0xff]
  %v179 = vld [vmem:[%s5 + $0x20] sm:$0xff]
  %v180 = vld [vmem:[%s5 + $0x28] sm:$0xff]
  %v181 = vld [vmem:[%s6] sm:$0x1]
  %v183 = vlaneseq
  %v184 = vshrl.u32 %v183, 7
  %v185 = vsub.s32 0, %v184
  %v186 = vrot.slane %v181, %v185
  %vm188 = vcmask 392192
  %v190 = vsel %vm188, %v174, 0
  %192 = vmatprep.subr.mxu0 0.0
  %193 = vmatpush1.msra.mxu0 %v175
  %194 = vmatprep.subr.mxu0 0.0
  %195 = vmatpush1.msra.mxu0 %v176
  %196 = vmatprep.subr.mxu0 0.0
  %197 = vmatpush1.msra.mxu0 %v177
  %198 = vmatprep.subr.mxu0 0.0
  %199 = vmatpush1.msra.mxu0 %v178
  %200 = vmatprep.subr.mxu0 0.0
  %201 = vmatpush1.msra.mxu0 %v179
  %202 = vmatprep.subr.mxu0 0.0
  %203 = vmatpush1.msra.mxu0 %v180
  %204 = vmatprep.subr.mxu0 0.0
  %205 = vmatpush1.msra.mxu0 0.0
  %206 = vmatprep.subr.mxu0 0.0
  %207 = vmatpush1.msra.mxu0 0.0
  %208 = vmatprep.subr.mxu0 0.0
  %209 = vmatpush1.msra.mxu0 0.0
  %210 = vmatprep.subr.mxu0 0.0
  %211 = vmatpush1.msra.mxu0 0.0
  %212 = vmatprep.subr.mxu0 0.0
  %213 = vmatpush1.msra.mxu0 0.0
  %214 = vmatprep.subr.mxu0 0.0
  %215 = vmatpush1.msra.mxu0 0.0
  %216 = vmatprep.subr.mxu0 0.0
  %217 = vmatpush1.msra.mxu0 0.0
  %218 = vmatprep.subr.mxu0 0.0
  %219 = vmatpush1.msra.mxu0 0.0
  %220 = vmatprep.subr.mxu0 0.0
  %221 = vmatpush1.msra.mxu0 0.0
  %222 = vmatprep.subr.mxu0 0.0
  %223 = vmatpush1.msra.mxu0 0.0
  %224 = vmatprep.subr.mxu0 0.0
  %225 = vmatpush1.msra.mxu0 0.0
  %226 = vmatprep.subr.mxu0 0.0
  %227 = vmatpush1.msra.mxu0 0.0
  %228 = vmatprep.subr.mxu0 0.0
  %229 = vmatpush1.msra.mxu0 0.0
  %230 = vmatprep.subr.mxu0 0.0
  %231 = vmatpush1.msra.mxu0 0.0
  %232 = vmatprep.subr.mxu0 0.0
  %233 = vmatpush1.msra.mxu0 0.0
  %234 = vmatprep.subr.mxu0 0.0
  %235 = vmatpush1.msra.mxu0 0.0
  %236 = vmatprep.subr.mxu0 0.0
  %237 = vmatpush1.msra.mxu0 0.0
  %238 = vmatprep.subr.mxu0 0.0
  %239 = vmatpush1.msra.mxu0 0.0
  %240 = vmatprep.subr.mxu0 0.0
  %241 = vmatpush1.msra.mxu0 0.0
  %242 = vmatprep.subr.mxu0 0.0
  %243 = vmatpush1.msra.mxu0 0.0
  %244 = vmatprep.subr.mxu0 0.0
  %245 = vmatpush1.msra.mxu0 0.0
  %246 = vmatprep.subr.mxu0 0.0
  %247 = vmatpush1.msra.mxu0 0.0
  %248 = vmatprep.subr.mxu0 0.0
  %249 = vmatpush1.msra.mxu0 0.0
  %250 = vmatprep.subr.mxu0 0.0
  %251 = vmatpush1.msra.mxu0 0.0
  %252 = vmatprep.subr.mxu0 0.0
  %253 = vmatpush1.msra.mxu0 0.0
  %254 = vmatprep.subr.mxu0 0.0
  %255 = vmatpush1.msra.mxu0 0.0
  %256 = vmatprep.mubr.f32.mxu0 0.0
  %257 = vmatmul.mubr.f32.gmra.mrb[0].mxu0 %v190
  %v258 = vpop.f32.mrb[0].mxu0
  %v259 = vadd.f32 %v186, %v258
  %v260 = vpop.f32.mrb[0].mxu0
  %261 = vdwg.mxu0
  %262 = vrot.lane.b32.xlu0 %v26, 121
  %v263 = vpop.permute.xlu0 %262
  %v265 = vmul.f32 %v259, %v263
  %vm266 = vcmask 48128
  %v267 = vsel %vm266, %v265, 0.0
  %268 = vadd.xlane.f32.xlu0 %v267
  %v269 = vpop.xlane.xlu0 %268
  %v270 = vadd.f32 %v269, %v26
  %272 = vrot.lane.b32.xlu0 %v259, 122
  %v273 = vpop.permute.xlu0 %272
  %v275 = vadd.f32 %v270, %v273
  %vm276 = vcmask 7168
  %277 = vst.msk [vmem:[%s7] sm:$0xff] %vm276, %v275
  // Predicated region
  $region30: #{tpu_custom_call.1} parent=0 // pred_check
    _
  $region31: #{tpu_custom_call.1} parent=0 // pred_check_branch
    %279 = sbr.rel (0) target = $region33
  $region32: #{tpu_custom_call.1} parent=0 // pred_region
    _
  $region33: #{tpu_custom_call.1} parent=0 // pred_fallthru
    _
  // Predicated region
  $region34: #{tpu_custom_call.1} parent=0 // pred_check
    _
  $region35: #{tpu_custom_call.1} parent=0 // pred_check_branch
    %281 = sbr.rel (0) target = $region37
  $region36: #{tpu_custom_call.1} parent=0 // pred_region
    _
  $region37: #{tpu_custom_call.1} parent=0 // pred_fallthru
    _

</llo_original>
